<compile_context>
chip_gen: v5e
topology: v5e:2x2
jax: 0.10.0
libtpu: 0.0.40
codegen_flags: <defaults>
</compile_context>

<pallas_src>
import numpy as np
import jax
import jax.numpy as jnp
from jax.experimental import pallas as pl
from jax.experimental.pallas import tpu as pltpu


def time_encode_kernel(ts_ref, freq_ref, phase_ref, out_ref):
    # ts_ref:    (T, P)   P packed timestamps per output row
    # freq_ref:  (1, L)   L = P * D, freq tiled P times along lanes
    # phase_ref: (1, L)
    # out_ref:   (T, L)
    ts = ts_ref[...]         # (T, P)
    freq = freq_ref[...]     # (1, L)
    phase = phase_ref[...]   # (1, L)
    T, P = ts.shape
    L = freq.shape[1]
    D = L // P

    if P == 1:
        ts_wide = jnp.broadcast_to(ts, (T, L))
    else:
        # Broadcast each packed column j into its D-lane group (VPU/XLU; no MXU
        # so the f32 values stay bit-exact), then concatenate to (T, L).
        cols = [jnp.broadcast_to(ts[:, j:j + 1], (T, D)) for j in range(P)]
        ts_wide = jnp.concatenate(cols, axis=-1)

    # (T, L) * (1, L) + (1, L): VPU; cos: EUP polynomial.
    out_ref[...] = jnp.cos(ts_wide * freq + phase)


def time_encode(ts, basis_freq, phase):
    """ts: [B, S] f32; basis_freq, phase: [D] f32 -> [B, S, D] f32."""
    B, S = ts.shape
    D = basis_freq.shape[0]
    ts = ts.astype(jnp.float32)
    N = B * S

    # Lane packing factor: fill all 128 lanes of each output row.
    if D <= 128 and 128 % D == 0:
        P = 128 // D
    else:
        P = 1  # TODO(synk): pad D up to a lane multiple for non-divisor widths
    L = P * D

    Np = pl.cdiv(N, P)                               # packed rows needed
    # Rows per tile: large (memory-bound sweet spot ~512 on v6e), multiple of 8,
    # but never bigger than the (padded) problem itself.
    T = min(512, ((Np + 7) // 8) * 8)
    T = max(T, 8)
    Np_pad = pl.cdiv(Np, T) * T                      # pad so every tile is full
    N_pad = Np_pad * P

    ts_flat = ts.reshape(N)
    if N_pad != N:
        ts_flat = jnp.pad(ts_flat, (0, N_pad - N))   # pad rows are sliced off
    ts_packed = ts_flat.reshape(Np_pad, P)

    freq_row = jnp.tile(basis_freq.astype(jnp.float32), P).reshape(1, L)
    phase_row = jnp.tile(phase.astype(jnp.float32), P).reshape(1, L)

    grid = (Np_pad // T,)

    out_packed = pl.pallas_call(
        time_encode_kernel,
        out_shape=jax.ShapeDtypeStruct((Np_pad, L), jnp.float32),
        grid=grid,
        in_specs=[
            pl.BlockSpec((T, P), lambda i: (i, 0)),   # packed timestamps
            pl.BlockSpec((1, L), lambda i: (0, 0)),   # shared tiled freq
            pl.BlockSpec((1, L), lambda i: (0, 0)),   # shared tiled phase
        ],
        out_specs=pl.BlockSpec((T, L), lambda i: (i, 0)),
        compiler_params=pltpu.CompilerParams(
            dimension_semantics=("parallel",)),
        cost_estimate=pl.CostEstimate(
            flops=2 * N_pad * D,
            transcendentals=N_pad * D,
            bytes_accessed=4 * (N_pad + N_pad * D + 2 * L)),
    )(ts_packed, freq_row, phase_row)

    # (Np_pad, P*D) -> (N_pad, D): contiguous, so packed lane groups map back
    # to consecutive original rows.  Slice off the pad and restore [B, S, D].
    return out_packed.reshape(N_pad, D)[:N].reshape(B, S, D)


if __name__ == "__main__":
    # Small shapes consistent with the module: batch=2, seq_len=8, time_dim=32.
    B, S, D = 2, 8, 32

    # Deterministic parameter init exactly as in __init__:
    #   basis_freq = 1 / 10 ** linspace(0, 9, D), phase = zeros(D)
    basis_freq = jnp.asarray(1.0 / 10.0 ** np.linspace(0, 9, D),
                             dtype=jnp.float32)
    phase = jnp.zeros((D,), dtype=jnp.float32)

    # Deterministic example input (timestamps).
    key = jax.random.PRNGKey(0)
    ts = jax.random.uniform(key, (B, S), dtype=jnp.float32,
                            minval=0.0, maxval=100.0)

    out = time_encode(ts, basis_freq, phase)
    out = jax.block_until_ready(out)

    # Pure-JAX reference (same semantics as the torch forward).
    ref = jnp.cos(ts[:, :, None] * basis_freq[None, None, :]
                  + phase[None, None, :])
    assert out.shape == (B, S, D)
    np.testing.assert_allclose(np.asarray(out), np.asarray(ref),
                               rtol=1e-5, atol=1e-5)

    print("KERNEL_OK")
</pallas_src>

<mosaic_0001>
module attributes {stable_mosaic.version = 11 : i64} {
  func.func @time_encode_kernel(%arg0: i32, %arg1: memref<8x4xf32, #tpu.memory_space<vmem>>, %arg2: memref<1x128xf32, #tpu.memory_space<vmem>>, %arg3: memref<1x128xf32, #tpu.memory_space<vmem>>, %arg4: memref<8x128xf32, #tpu.memory_space<vmem>>) attributes {dimension_semantics = [#tpu.dimension_semantics<parallel>], iteration_bounds = array<i64: 1>, scalar_prefetch = 0 : i64, scratch_operands = 0 : i64, tpu.core_type = #tpu.core_type<tc>, window_params = [{transform_indices = @transform_0, window_bounds = array<i64: 8, 4>}, {pipeline_mode = #tpu.pipeline_mode<synchronous>, transform_indices = @transform_1, window_bounds = array<i64: 1, 128>}, {pipeline_mode = #tpu.pipeline_mode<synchronous>, transform_indices = @transform_2, window_bounds = array<i64: 1, 128>}, {transform_indices = @transform_3, window_bounds = array<i64: 8, 128>}]} {
    %c0 = arith.constant 0 : index
    %c0_0 = arith.constant 0 : index
    %0 = vector.load %arg1[%c0, %c0_0] : memref<8x4xf32, #tpu.memory_space<vmem>>, vector<8x4xf32>
    %c0_1 = arith.constant 0 : index
    %c0_2 = arith.constant 0 : index
    %1 = vector.load %arg2[%c0_1, %c0_2] : memref<1x128xf32, #tpu.memory_space<vmem>>, vector<1x128xf32>
    %c0_3 = arith.constant 0 : index
    %c0_4 = arith.constant 0 : index
    %2 = vector.load %arg3[%c0_3, %c0_4] : memref<1x128xf32, #tpu.memory_space<vmem>>, vector<1x128xf32>
    %3 = vector.extract_strided_slice %0 {offsets = [0, 0], sizes = [8, 1], strides = [1, 1]} : vector<8x4xf32> to vector<8x1xf32>
    %4 = vector.shape_cast %3 : vector<8x1xf32> to vector<8x1xf32>
    %5 = vector.broadcast %4 : vector<8x1xf32> to vector<8x32xf32>
    %6 = vector.extract_strided_slice %0 {offsets = [0, 1], sizes = [8, 1], strides = [1, 1]} : vector<8x4xf32> to vector<8x1xf32>
    %7 = vector.shape_cast %6 : vector<8x1xf32> to vector<8x1xf32>
    %8 = vector.broadcast %7 : vector<8x1xf32> to vector<8x32xf32>
    %9 = vector.extract_strided_slice %0 {offsets = [0, 2], sizes = [8, 1], strides = [1, 1]} : vector<8x4xf32> to vector<8x1xf32>
    %10 = vector.shape_cast %9 : vector<8x1xf32> to vector<8x1xf32>
    %11 = vector.broadcast %10 : vector<8x1xf32> to vector<8x32xf32>
    %12 = vector.extract_strided_slice %0 {offsets = [0, 3], sizes = [8, 1], strides = [1, 1]} : vector<8x4xf32> to vector<8x1xf32>
    %13 = vector.shape_cast %12 : vector<8x1xf32> to vector<8x1xf32>
    %14 = vector.broadcast %13 : vector<8x1xf32> to vector<8x32xf32>
    %15 = tpu.concatenate %5, %8, %11, %14 in 1 : vector<8x32xf32>, vector<8x32xf32>, vector<8x32xf32>, vector<8x32xf32> -> vector<8x128xf32>
    %16 = vector.broadcast %1 : vector<1x128xf32> to vector<8x128xf32>
    %17 = arith.mulf %15, %16 : vector<8x128xf32>
    %18 = vector.broadcast %2 : vector<1x128xf32> to vector<8x128xf32>
    %19 = arith.addf %17, %18 : vector<8x128xf32>
    %20 = math.cos %19 : vector<8x128xf32>
    %c0_5 = arith.constant 0 : index
    %c0_6 = arith.constant 0 : index
    %21 = vector.load %arg4[%c0_5, %c0_6] : memref<8x128xf32, #tpu.memory_space<vmem>>, vector<8x128xf32>
    tpu.vector_store %arg4[%c0_5, %c0_6], %20 {strides = array<i32>} : memref<8x128xf32, #tpu.memory_space<vmem>>, vector<8x128xf32>,
    return
  }
  func.func @transform_0(%arg0: i32) -> (i32, i32) {
    %c0_i32 = arith.constant 0 : i32
    %c0_i32_0 = arith.constant 0 : i32
    return %arg0, %c0_i32 : i32, i32
  }
  func.func @transform_1(%arg0: i32) -> (i32, i32) {
    %c0_i32 = arith.constant 0 : i32
    %c0_i32_0 = arith.constant 0 : i32
    %c0_i32_1 = arith.constant 0 : i32
    return %c0_i32, %c0_i32_0 : i32, i32
  }
  func.func @transform_2(%arg0: i32) -> (i32, i32) {
    %c0_i32 = arith.constant 0 : i32
    %c0_i32_0 = arith.constant 0 : i32
    %c0_i32_1 = arith.constant 0 : i32
    return %c0_i32, %c0_i32_0 : i32, i32
  }
  func.func @transform_3(%arg0: i32) -> (i32, i32) {
    %c0_i32 = arith.constant 0 : i32
    %c0_i32_0 = arith.constant 0 : i32
    return %arg0, %c0_i32 : i32, i32
  }
}

</mosaic_0001>

<llo_original>
// kernel: tpu_custom_call.1
$region0: #{tpu_custom_call.1}
  #allocation0 [shape = 'u32[]', space=smem, size = 0x4, offset = 0x4, fixed_abs, tag = 'smem constant byte address 0x4 - core index']
  #allocation1 [shape = 'u32[72,128]{1,0:T(1,128)}', space=vmem, size = 0x9000, scoped, tag = 'internal scratch']
  %s0 = inlined_call_operand.vmem [shape: f32[8,4], index: 0, kind: input, shape index: {}]
  %s1 = inlined_call_operand.vmem [shape: f32[1,128], index: 1, kind: input, shape index: {}]
  %s2 = inlined_call_operand.vmem [shape: f32[1,128], index: 2, kind: input, shape index: {}]
  %s3 = inlined_call_operand.hbm [shape: f32[8,128], index: 3, kind: output, shape index: {}]
  %s4 = sld [smem:[#allocation0]]
  $region22: #{tpu_custom_call.1} parent=0
    _
  %s6 = ssub.s32 1, %s4
  %s7 = scalar_select 0, %s6, %s4
  $region1: #{tpu_custom_call.1} parent=0
    #allocation2 [shape = 'u8[4096]{0}', space=vmem, size = 0x1000, scoped, tag = 'output window, operand 0, single buffered']
    #allocation3 [shape = 's32[1]{0}', space=sflag, size = 0x4, scoped, tag = 'scoped memory for tpu_custom_call.1']
    %8 = vsyncpa [#allocation3], 0
    // Predicated region
    $region2: #{tpu_custom_call.1} parent=1 // pred_check
      _
    $region3: #{tpu_custom_call.1} parent=1 // pred_check_branch
      %10 = sbr.rel (0) target = $region5
    $region4: #{tpu_custom_call.1} parent=1 // pred_region
      _
    $region5: #{tpu_custom_call.1} parent=1 // pred_fallthru
      _
    // Predicated region
    $region6: #{tpu_custom_call.1} parent=1 // pred_check
      _
    $region7: #{tpu_custom_call.1} parent=1 // pred_check_branch
      %12 = sbr.rel (0) target = $region9
    $region8: #{tpu_custom_call.1} parent=1 // pred_region
      _
    $region9: #{tpu_custom_call.1} parent=1 // pred_fallthru
      _
    // Predicated region
    $region10: #{tpu_custom_call.1} parent=1 // pred_check
      _
    $region11: #{tpu_custom_call.1} parent=1 // pred_check_branch
      %14 = sbr.rel (0) target = $region13
    $region12: #{tpu_custom_call.1} parent=1 // pred_region
      _
    $region13: #{tpu_custom_call.1} parent=1 // pred_fallthru
      _
    %v15 = vld [vmem:[%s0] sm:$0xff]
    %v16 = vld [vmem:[%s1] sm:$0x1]
    %v17 = vld [vmem:[%s2] sm:$0x1]
    %19 = vset.pattern.permute.xlu0 0
    %20 = vperm.xlu0 %19, %v15
    %v21 = vpop.permute.xlu0 %20
    %23 = vset.pattern.permute.xlu0 1
    %24 = vperm.xlu0 %23, %v15
    %v25 = vpop.permute.xlu0 %24
    %27 = vset.pattern.permute.xlu0 2
    %28 = vperm.xlu0 %27, %v15
    %v29 = vpop.permute.xlu0 %28
    %31 = vset.pattern.permute.xlu0 3
    %32 = vperm.xlu0 %31, %v15
    %v33 = vpop.permute.xlu0 %32
    %vm35 = vcmask 261120
    %v36 = vsel %vm35, %v21, %v25
    %vm37 = vcmask 523264
    %v38 = vsel %vm37, %v36, %v29
    %vm39 = vcmask 785408
    %v40 = vsel %vm39, %v38, %v33
    %v42 = vperm.slane %v16, 0
    %v44 = vmul.f32 %v40, %v42
    %v46 = vperm.slane %v17, 0
    %v48 = vadd.f32 %v44, %v46
    %v49 = vand.u32 2147483647, %v48
    %vm50 = vcmp.le.f32.partialorder %v49, 0.7853982
    %vm51 = vcmp.lt.s32.totalorder %v48, 0
    %v52 = vand.u32 %v48, 2139095040
    %v53 = vshrl.u32 %v52, 23
    %v54 = vsub.s32 %v53, 127
    %v55 = vand.u32 2147483647, %v48
    %v56 = vand.u32 %v55, 8388607
    %v57 = vor.u32 %v56, 8388608
    %v58 = vsub.s32 0, %v57
    %v59 = vadd.s32 %v54, 1
    %vm60 = vcmp.gt.s32.totalorder %v59, 0
    %v61 = vsel %vm60, %v59, 0
    %v62 = vshrl.u32 %v61, 5
    %v63 = vand.u32 %v61, 31
    %v64 = vsub.s32 32, %v63
    %v65 = vshrl.u32 683565275, %v64
    %v66 = vshll.u32 683565275, %v63
    %v67 = vshrl.u32 2475754826, %v64
    %v68 = vor.u32 %v66, %v67
    %v69 = vshll.u32 2475754826, %v63
    %v70 = vshrl.u32 2131351028, %v64
    %v71 = vor.u32 %v69, %v70
    %v72 = vshll.u32 2131351028, %v63
    %v73 = vshrl.u32 2102212464, %v64
    %v74 = vor.u32 %v72, %v73
    %v75 = vshll.u32 2102212464, %v63
    %v76 = vshrl.u32 920167782, %v64
    %v77 = vor.u32 %v75, %v76
    %v78 = vshll.u32 920167782, %v63
    %v79 = vshrl.u32 1326507024, %v64
    %v80 = vor.u32 %v78, %v79
    %vm81 = vcmp.lt.s32.totalorder %v62, 1
    %vm82 = vcmp.lt.s32.totalorder %v62, 2
    %vm83 = vcmp.lt.s32.totalorder %v62, 3
    %vm84 = vcmp.lt.s32.totalorder %v62, 4
    %v85 = vsel %vm81, %v65, %v68
    %v86 = vsel %vm84, %v74, 2102212464
    %v87 = vsel %vm83, %v71, %v86
    %v88 = vsel %vm82, %v85, %v87
    %v89 = vsel %vm81, %v68, %v71
    %v90 = vsel %vm84, %v77, 920167782
    %v91 = vsel %vm83, %v74, %v90
    %v92 = vsel %vm82, %v89, %v91
    %v93 = vsel %vm81, %v71, %v74
    %v94 = vsel %vm84, %v80, 1326507024
    %v95 = vsel %vm83, %v77, %v94
    %v96 = vsel %vm82, %v93, %v95
    %v97 = vshll.u32 %v57, 8
    %v98 = vand.u32 %v97, 65535
    %v99 = vshrl.u32 %v97, 16
    %v100 = vand.u32 %v96, 65535
    %v101 = vshrl.u32 %v96, 16
    %v102 = vmul.u32 %v98, %v100
    %v103 = vmul.u32 %v98, %v101
    %v104 = vmul.u32 %v99, %v100
    %v105 = vmul.u32 %v99, %v101
    %v106 = vshll.u32 %v103, 16
    %v107 = vshrl.u32 %v103, 16
    %v108 = vshll.u32 %v104, 16
    %v109 = vshrl.u32 %v104, 16
    %vm110 = vc.u32 %v102, %v106
    %v111 = vsel %vm110, 1, 0
    %v112 = vadd.s32 %v102, %v106
    %v113 = vadd.s32 %v105, %v111
    %vm114 = vc.u32 %v112, %v108
    %v115 = vsel %vm114, 1, 0
    %v116 = vadd.s32 %v112, %v108
    %v117 = vadd.s32 %v113, %v115
    %v118 = vadd.s32 %v117, %v107
    %v119 = vadd.s32 %v118, %v109
    %v120 = vand.u32 %v97, 65535
    %v121 = vshrl.u32 %v97, 16
    %v122 = vand.u32 %v92, 65535
    %v123 = vshrl.u32 %v92, 16
    %v124 = vmul.u32 %v120, %v122
    %v125 = vmul.u32 %v120, %v123
    %v126 = vmul.u32 %v121, %v122
    %v127 = vmul.u32 %v121, %v123
    %v128 = vshll.u32 %v125, 16
    %v129 = vshrl.u32 %v125, 16
    %v130 = vshll.u32 %v126, 16
    %v131 = vshrl.u32 %v126, 16
    %vm132 = vc.u32 %v124, %v128
    %v133 = vsel %vm132, 1, 0
    %v134 = vadd.s32 %v124, %v128
    %v135 = vadd.s32 %v127, %v133
    %vm136 = vc.u32 %v134, %v130
    %v137 = vsel %vm136, 1, 0
    %v138 = vadd.s32 %v134, %v130
    %v139 = vadd.s32 %v135, %v137
    %v140 = vadd.s32 %v139, %v129
    %v141 = vadd.s32 %v140, %v131
    %v142 = vmul.u32 %v97, %v88
    %v143 = vadd.s32 %v119, %v138
    %vm144 = vc.u32 %v119, %v138
    %v145 = vadd.s32 %v141, 1
    %v146 = vsel %vm144, %v145, %v141
    %v147 = vadd.s32 %v142, %v146
    %v148 = vadd.s32 %v147, 536870912
    %v149 = vshrl.u32 %v148, 30
    %v150 = vshll.u32 %v149, 30
    %v151 = vsub.s32 %v147, %v150
    %vm152 = vcmp.lt.s32.totalorder %v151, 0
    %v153 = vsub.s32 0, %v151
    %v154 = vsel %vm152, %v153, %v151
    %v155 = vclz %v154
    %v156 = vsub.s32 %v155, 2
    %vm157 = vcmp.gt.s32.totalorder 0, %v156
    %v158 = vsel %vm157, 0, %v156
    %v159 = vsub.s32 32, %v158
    %v160 = vshll.u32 %v151, %v158
    %v161 = vshrl.u32 %v143, %v159
    %v162 = vor.u32 %v160, %v161
    %v163 = vsub.s32 4294967266, %v158
    %v164 = vadd.s32 %v163, 127
    %v165 = vshll.u32 %v164, 23
    %v166 = vor.u32 4788187, %v165
    %v167 = vand.u32 2147483647, %v166
    %v169 = vcvt.s32.f32 %v162
    %v170 = vmul.f32 %v169, %v167
    %v171 = vxor.u32 %v170, 2147483648
    %v172 = vsel %vm51, %v171, %v170
    %v173 = vsub.s32 4, %v149
    %v174 = vsel %vm51, %v173, %v149
    %v175 = vsel %vm50, %v48, %v172
    %v176 = vsel %vm50, 0, %v174
    %v177 = vmul.f32 %v175, %v175
    %v178 = vmul.f32 %v177, -0.001358992
    %v179 = vadd.f32 %v178, 0.041655596
    %v180 = vmul.f32 %v177, %v179
    %v181 = vadd.f32 %v180, -0.4999988
    %v182 = vmul.f32 %v177, %v181
    %v183 = vadd.f32 1.0, %v182
    %v184 = vmul.f32 %v175, %v175
    %v185 = vmul.f32 %v184, -0.00019511016
    %v186 = vadd.f32 %v185, 0.008332121
    %v187 = vmul.f32 %v184, %v186
    %v188 = vadd.f32 %v187, -0.16666654
    %v189 = vmul.f32 %v184, %v188
    %v190 = vadd.f32 %v189, 1.0
    %v191 = vmul.f32 %v190, %v175
    %vm192 = vweird.f32 %v48
    %v193 = vand.u32 %v176, 3
    %vm194 = vcmp.lt.s32.totalorder %v193, 2
    %vm195 = vcmp.eq.s32.totalorder %v193, 0
    %v196 = vxor.u32 %v191, 2147483648
    %v197 = vsel %vm195, %v183, %v196
    %vm198 = vcmp.eq.s32.totalorder %v193, 2
    %v199 = vxor.u32 %v183, 2147483648
    %v200 = vsel %vm198, %v199, %v191
    %v201 = vsel %vm194, %v197, %v200
    %v202 = vsel %vm192, nan, %v201
    %203 = vst [vmem:[#allocation2] sm:$0xff] %v202
    // Predicated region
    $region14: #{tpu_custom_call.1} parent=1 // pred_check
      _
    $region15: #{tpu_custom_call.1} parent=1 // pred_check_branch
      %205 = sbr.rel (0) target = $region17
    $region16: #{tpu_custom_call.1} parent=1 // pred_region
      %207 = vsyncadd [#allocation3], 0
      %s209 = sshll.u32 [#allocation2], 4
      %s210 = int_to_ptr.vmem [resolvable:$true] %s209
      %s211 = sshll.u32 %s3, 4
      %s212 = int_to_ptr.hbm [resolvable:$true] %s211
      %214 = dma.vmem_to_hbm [thread:$0]  %s210, 128, %s212, [#allocation3]
    $region17: #{tpu_custom_call.1} parent=1 // pred_fallthru
      _
    // Predicated region
    $region18: #{tpu_custom_call.1} parent=1 // pred_check
      _
    $region19: #{tpu_custom_call.1} parent=1 // pred_check_branch
      %216 = sbr.rel (0) target = $region21
    $region20: #{tpu_custom_call.1} parent=1 // pred_region
      %218 = dma.done [#allocation3], 128
    $region21: #{tpu_custom_call.1} parent=1 // pred_fallthru
      _
    %219 = vsyncpa [#allocation3], 1

</llo_original>
